<compile_context>
chip_gen: v7x
topology: tpu7x:2x2x1
jax: 0.10.0
libtpu: 0.0.40
codegen_flags: <defaults>
</compile_context>

<pallas_src>
import numpy as np
import jax
import jax.numpy as jnp
from jax.experimental import pallas as pl
from jax.experimental.pallas import tpu as pltpu

LANE = 128   # lane width / feature padding
TM = 128     # output-row tile (grid axis)


def _round_up(x, m):
    return ((x + m - 1) // m) * m


def _pad2(x, rows, cols):
    x = jnp.asarray(x, jnp.float32)
    return jnp.pad(x, ((0, rows - x.shape[0]), (0, cols - x.shape[1])))


# ---------------- Pallas kernels ----------------

def _sage_block(a_ref, inv_ref, h_ref, wn_ref, wa_ref, b_ref):
    """One SAGE mean-aggregator + ReLU encoder for one row tile of output nodes."""
    tm = a_ref.shape[0]
    row0 = pl.multiple_of(pl.program_id(0) * tm, tm)
    # Prefix-identity self embedding: output row i of this layer is node order[k][i],
    # which (by host ordering) is also row i of h_prev.  Stays bf16 -> no cast pass.
    node = h_ref[pl.ds(row0, tm), :]
    # Mean aggregation: exact 0/1 adjacency matmul, then exact f32 1/deg scale
    # folded into the single f32->bf16 cast (empty neighborhoods -> inv_deg = 0).
    neigh = jnp.dot(a_ref[...], h_ref[...], preferred_element_type=jnp.float32)
    neigh = (inv_ref[...] * neigh).astype(jnp.bfloat16)
    z = (jnp.dot(node, wn_ref[...], preferred_element_type=jnp.float32)
         + jnp.dot(neigh, wa_ref[...], preferred_element_type=jnp.float32)
         + b_ref[...])
    return jnp.maximum(z, 0.0).astype(jnp.bfloat16)


def sage_layer_kernel(a_ref, inv_ref, h_ref, wn_ref, wa_ref, b_ref, out_ref):
    out_ref[...] = _sage_block(a_ref, inv_ref, h_ref, wn_ref, wa_ref, b_ref)


def sage_layer_cls_kernel(a_ref, inv_ref, h_ref, wn_ref, wa_ref, b_ref,
                          wc_ref, bc_ref, out_ref):
    h_new = _sage_block(a_ref, inv_ref, h_ref, wn_ref, wa_ref, b_ref)
    out_ref[...] = (jnp.dot(h_new, wc_ref[...], preferred_element_type=jnp.float32)
                    + bc_ref[...])


def _vmem_limit_bytes(n_in_pad, d_pad, tm, last):
    bf16, f32 = 2, 4
    ws = (n_in_pad * d_pad * bf16          # resident h_prev slab
          + 2 * tm * n_in_pad * bf16       # double-buffered A row tiles
          + 2 * tm * f32                   # double-buffered inv_deg tiles
          + 2 * d_pad * d_pad * bf16       # Wn, Wa
          + d_pad * f32                    # bias
          + 2 * tm * d_pad * f32)          # double-buffered output tiles (worst: f32)
    if last:
        ws += d_pad * d_pad * bf16 + d_pad * f32
    return int(min(max(2 * ws, 32 * 1024 * 1024), 64 * 1024 * 1024))


# ---------------- NodeClassifier wrapper (host-side glue) ----------------

class NodeClassifierPallas:
    def __init__(self, num_classes, input_dim, hidden_dims, K=2, agg_method='mean', *,
                 key=jax.random.PRNGKey(0)):
        assert len(hidden_dims) == K
        assert agg_method == 'mean'
        self.K = K
        self.num_classes = num_classes
        self.input_dim = input_dim
        self.d_pad = _round_up(max([input_dim] + list(hidden_dims) + [num_classes]), LANE)

        dims = [input_dim] + list(hidden_dims)
        self.layer_params = []          # raw f32 (for reference check)
        self.layer_params_padded = []   # lane-dense bf16 weights + f32 bias (for kernel)
        for in_dim, out_dim in zip(dims[:-1], dims[1:]):
            key, k1, k2 = jax.random.split(key, 3)
            w_full = 0.1 * jax.random.normal(k1, (2 * in_dim, out_dim), jnp.float32)
            b = 0.1 * jax.random.normal(k2, (1, out_dim), jnp.float32)
            w_node, w_neigh = w_full[:in_dim], w_full[in_dim:]
            self.layer_params.append((w_node, w_neigh, b))
            self.layer_params_padded.append((
                _pad2(w_node, self.d_pad, self.d_pad).astype(jnp.bfloat16),
                _pad2(w_neigh, self.d_pad, self.d_pad).astype(jnp.bfloat16),
                _pad2(b, 1, self.d_pad)))

        key, k1, k2 = jax.random.split(key, 3)
        self.w_cls = 0.1 * jax.random.normal(k1, (hidden_dims[-1], num_classes), jnp.float32)
        self.b_cls = 0.1 * jax.random.normal(k2, (1, num_classes), jnp.float32)
        self.w_cls_padded = _pad2(self.w_cls, self.d_pad, self.d_pad).astype(jnp.bfloat16)
        self.b_cls_padded = _pad2(self.b_cls, 1, self.d_pad)

    def __call__(self, batch_nodes, batch_adjList, features_table):
        K = self.K
        assert len(batch_nodes) == len(batch_adjList) == K + 1

        # Internal node orderings such that order[k] is a PREFIX of order[k-1]
        # (valid because B^k  is a subset of  B^{k-1} in GraphSAGE sampling).
        # This makes the self-embedding gather a no-op row prefix of h_prev.
        order = [None] * (K + 1)
        order[K] = list(batch_nodes[K])
        for k in range(K - 1, -1, -1):
            prev = set(order[k + 1])
            assert prev <= set(batch_nodes[k]), "B^{k+1} must be a subset of B^k"
            order[k] = order[k + 1] + [u for u in batch_nodes[k] if u not in prev]
        n_pad = [_round_up(max(len(order[k]), TM), TM) for k in range(K + 1)]
        # prefix property => per-layer padded row counts are non-increasing
        for k in range(1, K + 1):
            assert n_pad[k] <= n_pad[k - 1]

        # Initial features for order[0], zero-padded lane-dense, bf16.
        feats = np.asarray(features_table, dtype=np.float32)
        h0 = np.zeros((n_pad[0], self.d_pad), dtype=np.float32)
        h0[:len(order[0]), :self.input_dim] = feats[np.asarray(order[0])]
        h = jnp.asarray(h0, jnp.bfloat16)

        # NOTE: rows of h beyond the real node count become relu(junk @ W + b) after a
        # layer, but adjacency columns and self-prefix rows only ever reference indices
        # < len(order[k]), and the final output is sliced; the junk rows never leak.
        for k in range(1, K + 1):
            last = (k == K)
            idx_prev = {u: i for i, u in enumerate(order[k - 1])}
            n_out = len(order[k])
            A = np.zeros((n_pad[k], n_pad[k - 1]), dtype=np.float32)   # exact 0/1 counts
            inv = np.zeros((n_pad[k], 1), dtype=np.float32)            # f32 1/deg
            adj = batch_adjList[k - 1]
            for i, u in enumerate(order[k]):
                nbrs = adj[u]
                if nbrs:
                    inv[i, 0] = 1.0 / float(len(nbrs))
                    for v in nbrs:
                        A[i, idx_prev[v]] += 1.0

            wn, wa, b = self.layer_params_padded[k - 1]
            a_dev = jnp.asarray(A, jnp.bfloat16)       # 0/1 (and small counts): exact in bf16
            inv_dev = jnp.asarray(inv, jnp.float32)
            n_out_pad, n_in_pad = a_dev.shape
            d_pad = self.d_pad

            in_specs = [
                pl.BlockSpec((TM, n_in_pad), lambda i: (i, 0)),       # A row tile (dbuf DMA)
                pl.BlockSpec((TM, 1), lambda i: (i, 0)),              # inv_deg row tile
                pl.BlockSpec((n_in_pad, d_pad), lambda i: (0, 0)),    # h_prev, VMEM-resident
                pl.BlockSpec((d_pad, d_pad), lambda i: (0, 0)),       # W_node
                pl.BlockSpec((d_pad, d_pad), lambda i: (0, 0)),       # W_neigh
                pl.BlockSpec((1, d_pad), lambda i: (0, 0)),           # bias
            ]
            operands = [a_dev, inv_dev, h, wn, wa, b]
            if last:
                in_specs += [pl.BlockSpec((d_pad, d_pad), lambda i: (0, 0)),
                             pl.BlockSpec((1, d_pad), lambda i: (0, 0))]
                operands += [self.w_cls_padded, self.b_cls_padded]
                kernel, out_dtype = sage_layer_cls_kernel, jnp.float32
            else:
                kernel, out_dtype = sage_layer_kernel, jnp.bfloat16

            h = pl.pallas_call(
                kernel,
                grid=(n_out_pad // TM,),
                in_specs=in_specs,
                out_specs=pl.BlockSpec((TM, d_pad), lambda i: (i, 0)),
                out_shape=jax.ShapeDtypeStruct((n_out_pad, d_pad), out_dtype),
                compiler_params=pltpu.CompilerParams(
                    dimension_semantics=("parallel",),
                    vmem_limit_bytes=_vmem_limit_bytes(n_in_pad, d_pad, TM, last)),
            )(*operands)

        return h[:len(batch_nodes[K]), :self.num_classes]


# ---------------- pure-JAX f32 reference for validation ----------------

def reference_forward(model, batch_nodes, batch_adjList, features_table):
    idx = {u: i for i, u in enumerate(batch_nodes[0])}
    H = jnp.asarray(np.asarray(features_table)[np.asarray(batch_nodes[0])], jnp.float32)
    for k in range(1, model.K + 1):
        nodes_k = batch_nodes[k]
        sel = np.asarray([idx[u] for u in nodes_k], dtype=np.int32)
        node_embed = H[sel]
        neighs = []
        for u in nodes_k:
            nbrs = batch_adjList[k - 1][u]
            if nbrs:
                neighs.append(jnp.mean(H[np.asarray([idx[v] for v in nbrs])], axis=0))
            else:
                neighs.append(jnp.zeros((H.shape[1],), jnp.float32))
        neigh_embed = jnp.stack(neighs, axis=0)
        w_node, w_neigh, b = model.layer_params[k - 1]
        H = jax.nn.relu(node_embed @ w_node + neigh_embed @ w_neigh + b)
        idx = {u: i for i, u in enumerate(nodes_k)}
    return H @ model.w_cls + model.b_cls


if __name__ == "__main__":
    # ---- deterministic synthetic graph + features ----
    total_nodes = 24
    input_dim = 16
    hidden_dims = [32, 16]
    K = 2
    num_classes = 5

    key = jax.random.PRNGKey(0)
    key, kf, kw = jax.random.split(key, 3)
    features_table = jax.random.normal(kf, (total_nodes, input_dim), jnp.float32)

    def nbrs(u):  # deterministic sampled neighborhood
        return [(u + 1) % total_nodes, (u + 5) % total_nodes, (u + 7) % total_nodes]

    batch_nodes_K = list(range(8))                      # B^K: nodes to classify
    adj1 = {u: nbrs(u) for u in batch_nodes_K}          # graph for layer K
    batch_nodes_1 = sorted(set(batch_nodes_K) | {v for u in batch_nodes_K for v in adj1[u]})
    adj0 = {u: nbrs(u) for u in batch_nodes_1}          # graph for layer 1
    batch_nodes_0 = sorted(set(batch_nodes_1) | {v for u in batch_nodes_1 for v in adj0[u]})

    batch_nodes = [batch_nodes_0, batch_nodes_1, batch_nodes_K]
    batch_adjList = [adj0, adj1, {}]                    # last entry is a dummy

    model = NodeClassifierPallas(num_classes, input_dim, hidden_dims, K, 'mean', key=kw)

    logits = model(batch_nodes, batch_adjList, features_table)
    logits = jax.block_until_ready(logits)
    assert logits.shape == (len(batch_nodes_K), num_classes)

    ref = jax.block_until_ready(
        reference_forward(model, batch_nodes, batch_adjList, features_table))
    np.testing.assert_allclose(np.asarray(logits), np.asarray(ref), rtol=3e-2, atol=3e-2)

    print("KERNEL_OK")
</pallas_src>

<mosaic_0001>
module attributes {stable_mosaic.version = 11 : i64} {
  func.func @sage_layer_kernel(%arg0: i32, %arg1: memref<128x128xbf16, #tpu.memory_space<vmem>>, %arg2: memref<128x1xf32, #tpu.memory_space<vmem>>, %arg3: memref<128x128xbf16, #tpu.memory_space<vmem>>, %arg4: memref<128x128xbf16, #tpu.memory_space<vmem>>, %arg5: memref<128x128xbf16, #tpu.memory_space<vmem>>, %arg6: memref<1x128xf32, #tpu.memory_space<vmem>>, %arg7: memref<128x128xbf16, #tpu.memory_space<vmem>>) attributes {dimension_semantics = [#tpu.dimension_semantics<parallel>], iteration_bounds = array<i64: 1>, scalar_prefetch = 0 : i64, scratch_operands = 0 : i64, tpu.core_type = #tpu.core_type<tc>, window_params = [{transform_indices = @transform_0, window_bounds = array<i64: 128, 128>}, {transform_indices = @transform_1, window_bounds = array<i64: 128, 1>}, {pipeline_mode = #tpu.pipeline_mode<synchronous>, transform_indices = @transform_2, window_bounds = array<i64: 128, 128>}, {pipeline_mode = #tpu.pipeline_mode<synchronous>, transform_indices = @transform_3, window_bounds = array<i64: 128, 128>}, {pipeline_mode = #tpu.pipeline_mode<synchronous>, transform_indices = @transform_4, window_bounds = array<i64: 128, 128>}, {pipeline_mode = #tpu.pipeline_mode<synchronous>, transform_indices = @transform_5, window_bounds = array<i64: 1, 128>}, {transform_indices = @transform_6, window_bounds = array<i64: 128, 128>}]} {
    %c128_i32 = arith.constant 128 : i32
    %0 = arith.muli %arg0, %c128_i32 : i32
    %1 = tpu.assume_multiple %0, 128 : i32
    %2 = arith.index_cast %1 : i32 to index
    %c0 = arith.constant 0 : index
    %3 = vector.load %arg3[%2, %c0] : memref<128x128xbf16, #tpu.memory_space<vmem>>, vector<128x128xbf16>
    %c0_0 = arith.constant 0 : index
    %c0_1 = arith.constant 0 : index
    %4 = vector.load %arg1[%c0_0, %c0_1] : memref<128x128xbf16, #tpu.memory_space<vmem>>, vector<128x128xbf16>
    %c0_2 = arith.constant 0 : index
    %c0_3 = arith.constant 0 : index
    %5 = vector.load %arg3[%c0_2, %c0_3] : memref<128x128xbf16, #tpu.memory_space<vmem>>, vector<128x128xbf16>
    %cst = arith.constant dense<0.000000e+00> : vector<128x128xf32>
    %6 = tpu.matmul %4, %5, %cst {dimension_numbers = #tpu.dot_dimension_numbers<[1], [0], [0], [1], [0, 0, 1, 1], [], []>} : vector<128x128xbf16>, vector<128x128xbf16>, vector<128x128xf32> -> vector<128x128xf32>
    %c0_4 = arith.constant 0 : index
    %c0_5 = arith.constant 0 : index
    %7 = vector.load %arg2[%c0_4, %c0_5] : memref<128x1xf32, #tpu.memory_space<vmem>>, vector<128x1xf32>
    %8 = vector.broadcast %7 : vector<128x1xf32> to vector<128x128xf32>
    %9 = arith.mulf %8, %6 : vector<128x128xf32>
    %10 = arith.truncf %9 : vector<128x128xf32> to vector<128x128xbf16>
    %c0_6 = arith.constant 0 : index
    %c0_7 = arith.constant 0 : index
    %11 = vector.load %arg4[%c0_6, %c0_7] : memref<128x128xbf16, #tpu.memory_space<vmem>>, vector<128x128xbf16>
    %cst_8 = arith.constant dense<0.000000e+00> : vector<128x128xf32>
    %12 = tpu.matmul %3, %11, %cst_8 {dimension_numbers = #tpu.dot_dimension_numbers<[1], [0], [0], [1], [0, 0, 1, 1], [], []>} : vector<128x128xbf16>, vector<128x128xbf16>, vector<128x128xf32> -> vector<128x128xf32>
    %c0_9 = arith.constant 0 : index
    %c0_10 = arith.constant 0 : index
    %13 = vector.load %arg5[%c0_9, %c0_10] : memref<128x128xbf16, #tpu.memory_space<vmem>>, vector<128x128xbf16>
    %cst_11 = arith.constant dense<0.000000e+00> : vector<128x128xf32>
    %14 = tpu.matmul %10, %13, %cst_11 {dimension_numbers = #tpu.dot_dimension_numbers<[1], [0], [0], [1], [0, 0, 1, 1], [], []>} : vector<128x128xbf16>, vector<128x128xbf16>, vector<128x128xf32> -> vector<128x128xf32>
    %15 = arith.addf %12, %14 : vector<128x128xf32>
    %c0_12 = arith.constant 0 : index
    %c0_13 = arith.constant 0 : index
    %16 = vector.load %arg6[%c0_12, %c0_13] : memref<1x128xf32, #tpu.memory_space<vmem>>, vector<1x128xf32>
    %17 = vector.broadcast %16 : vector<1x128xf32> to vector<128x128xf32>
    %18 = arith.addf %15, %17 : vector<128x128xf32>
    %cst_14 = arith.constant 0.000000e+00 : f32
    %19 = vector.broadcast %cst_14 : f32 to vector<128x128xf32>
    %20 = arith.maximumf %18, %19 : vector<128x128xf32>
    %21 = arith.truncf %20 : vector<128x128xf32> to vector<128x128xbf16>
    %c0_15 = arith.constant 0 : index
    %c0_16 = arith.constant 0 : index
    %22 = vector.load %arg7[%c0_15, %c0_16] : memref<128x128xbf16, #tpu.memory_space<vmem>>, vector<128x128xbf16>
    tpu.vector_store %arg7[%c0_15, %c0_16], %21 {strides = array<i32>} : memref<128x128xbf16, #tpu.memory_space<vmem>>, vector<128x128xbf16>,
    return
  }
  func.func @transform_0(%arg0: i32) -> (i32, i32) {
    %c0_i32 = arith.constant 0 : i32
    %c0_i32_0 = arith.constant 0 : i32
    return %arg0, %c0_i32 : i32, i32
  }
  func.func @transform_1(%arg0: i32) -> (i32, i32) {
    %c0_i32 = arith.constant 0 : i32
    %c0_i32_0 = arith.constant 0 : i32
    return %arg0, %c0_i32 : i32, i32
  }
  func.func @transform_2(%arg0: i32) -> (i32, i32) {
    %c0_i32 = arith.constant 0 : i32
    %c0_i32_0 = arith.constant 0 : i32
    %c0_i32_1 = arith.constant 0 : i32
    return %c0_i32, %c0_i32_0 : i32, i32
  }
  func.func @transform_3(%arg0: i32) -> (i32, i32) {
    %c0_i32 = arith.constant 0 : i32
    %c0_i32_0 = arith.constant 0 : i32
    %c0_i32_1 = arith.constant 0 : i32
    return %c0_i32, %c0_i32_0 : i32, i32
  }
  func.func @transform_4(%arg0: i32) -> (i32, i32) {
    %c0_i32 = arith.constant 0 : i32
    %c0_i32_0 = arith.constant 0 : i32
    %c0_i32_1 = arith.constant 0 : i32
    return %c0_i32, %c0_i32_0 : i32, i32
  }
  func.func @transform_5(%arg0: i32) -> (i32, i32) {
    %c0_i32 = arith.constant 0 : i32
    %c0_i32_0 = arith.constant 0 : i32
    %c0_i32_1 = arith.constant 0 : i32
    return %c0_i32, %c0_i32_0 : i32, i32
  }
  func.func @transform_6(%arg0: i32) -> (i32, i32) {
    %c0_i32 = arith.constant 0 : i32
    %c0_i32_0 = arith.constant 0 : i32
    return %arg0, %c0_i32 : i32, i32
  }
}

</mosaic_0001>

<llo_original>
// kernel: tpu_custom_call.1
$region0: #{tpu_custom_call.1}
  #allocation0 [shape = 'u32[]', space=smem, size = 0x4, offset = 0x4, fixed_abs, tag = 'smem constant byte address 0x4 - core index']
  #allocation1 [shape = 'u32[144,128]{1,0:T(1,128)}', space=vmem, size = 0x12000, scoped, tag = 'internal scratch']
  %s0 = inlined_call_operand.vmem [shape: bf16[128,128], index: 0, kind: input, shape index: {}]
  %s1 = inlined_call_operand.vmem [shape: f32[128,1], index: 1, kind: input, shape index: {}]
  %s2 = inlined_call_operand.vmem [shape: bf16[128,128], index: 2, kind: input, shape index: {}]
  %s3 = inlined_call_operand.hbm [shape: bf16[128,128], index: 3, kind: input, shape index: {}]
  %s4 = inlined_call_operand.hbm [shape: bf16[128,128], index: 4, kind: input, shape index: {}]
  %s5 = inlined_call_operand.vmem [shape: f32[1,128], index: 5, kind: input, shape index: {}]
  %s6 = inlined_call_operand.hbm [shape: bf16[128,128], index: 6, kind: output, shape index: {}]
  %s7 = sld [smem:[#allocation0]]
  $region42: #{tpu_custom_call.1} parent=0
    _
  %s9 = ssub.s32 1, %s7
  %s10 = scalar_select 0, %s9, %s7
  $region1: #{tpu_custom_call.1} parent=0
    #allocation2 [shape = 'u8[32768]{0}', space=vmem, size = 0x8000, scoped, tag = 'input window, operand 3, single buffered']
    #allocation3 [shape = 's32[1]{0}', space=sflag, size = 0x4, scoped, tag = 'scoped memory for tpu_custom_call.1']
    #allocation4 [shape = 's32[1]{0}', space=sflag, size = 0x4, scoped, tag = 'scoped memory for tpu_custom_call.1']
    #allocation5 [shape = 'u8[32768]{0}', space=vmem, size = 0x8000, scoped, tag = 'input window, operand 4, single buffered']
    #allocation6 [shape = 's32[1]{0}', space=sflag, size = 0x4, scoped, tag = 'scoped memory for tpu_custom_call.1']
    #allocation7 [shape = 'u8[32768]{0}', space=vmem, size = 0x8000, scoped, tag = 'output window, operand 0, single buffered']
    %11 = vsyncpa [#allocation3], 0
    %12 = vsyncpa [#allocation6], 0
    %13 = vsyncpa [#allocation4], 0
    // Predicated region
    $region2: #{tpu_custom_call.1} parent=1 // pred_check
      _
    $region3: #{tpu_custom_call.1} parent=1 // pred_check_branch
      %15 = sbr.rel (0) target = $region5
    $region4: #{tpu_custom_call.1} parent=1 // pred_region
      _
    $region5: #{tpu_custom_call.1} parent=1 // pred_fallthru
      _
    // Predicated region
    $region6: #{tpu_custom_call.1} parent=1 // pred_check
      _
    $region7: #{tpu_custom_call.1} parent=1 // pred_check_branch
      %17 = sbr.rel (0) target = $region9
    $region8: #{tpu_custom_call.1} parent=1 // pred_region
      _
    $region9: #{tpu_custom_call.1} parent=1 // pred_fallthru
      _
    // Predicated region
    $region10: #{tpu_custom_call.1} parent=1 // pred_check
      _
    $region11: #{tpu_custom_call.1} parent=1 // pred_check_branch
      %19 = sbr.rel (0) target = $region13
    $region12: #{tpu_custom_call.1} parent=1 // pred_region
      _
    $region13: #{tpu_custom_call.1} parent=1 // pred_fallthru
      _
    // Predicated region
    $region14: #{tpu_custom_call.1} parent=1 // pred_check
      _
    $region15: #{tpu_custom_call.1} parent=1 // pred_check_branch
      %21 = sbr.rel (0) target = $region17
    $region16: #{tpu_custom_call.1} parent=1 // pred_region
      %s23 = ssub.s32 1024, 1024
      %24 = vsyncadd [#allocation3], %s23
      %s25 = sshll.u32 [#allocation2], 4
      %s26 = int_to_ptr.vmem [resolvable:$true] %s25
      %31 = dma.hbm_to_vmem [thread:$0]  %s3, 1024, %s26, [#allocation3], 64, 64, 4
    $region17: #{tpu_custom_call.1} parent=1 // pred_fallthru
      _
    // Predicated region
    $region18: #{tpu_custom_call.1} parent=1 // pred_check
      _
    $region19: #{tpu_custom_call.1} parent=1 // pred_check_branch
      %33 = sbr.rel (0) target = $region21
    $region20: #{tpu_custom_call.1} parent=1 // pred_region
      %s35 = ssub.s32 1024, 1024
      %36 = vsyncadd [#allocation6], %s35
      %s37 = sshll.u32 [#allocation5], 4
      %s38 = int_to_ptr.vmem [resolvable:$true] %s37
      %43 = dma.hbm_to_vmem [thread:$0]  %s4, 1024, %s38, [#allocation6], 64, 64, 4
    $region21: #{tpu_custom_call.1} parent=1 // pred_fallthru
      _
    // Predicated region
    $region22: #{tpu_custom_call.1} parent=1 // pred_check
      _
    $region23: #{tpu_custom_call.1} parent=1 // pred_check_branch
      %45 = sbr.rel (0) target = $region25
    $region24: #{tpu_custom_call.1} parent=1 // pred_region
      _
    $region25: #{tpu_custom_call.1} parent=1 // pred_fallthru
      _
    // Predicated region
    $region26: #{tpu_custom_call.1} parent=1 // pred_check
      _
    $region27: #{tpu_custom_call.1} parent=1 // pred_check_branch
      %47 = sbr.rel (0) target = $region29
    $region28: #{tpu_custom_call.1} parent=1 // pred_region
      %48 = dma.done [#allocation3], 1024
    $region29: #{tpu_custom_call.1} parent=1 // pred_fallthru
      _
    // Predicated region
    $region30: #{tpu_custom_call.1} parent=1 // pred_check
      _
    $region31: #{tpu_custom_call.1} parent=1 // pred_check_branch
      %50 = sbr.rel (0) target = $region33
    $region32: #{tpu_custom_call.1} parent=1 // pred_region
      %51 = dma.done [#allocation6], 1024
    $region33: #{tpu_custom_call.1} parent=1 // pred_fallthru
      _
    %s53 = smul.u32 0, 128
    %s54 = sshra.s32 %s53, 3
    %s55 = sand.u32 %s53, 7
    %s56 = smul.addr %s54, 4
    %s57 = scalar_lea.vmem %s2, %s56
    %v58 = vld [vmem:[%s57] sm:$0xf]
    %v59 = vld [vmem:[%s57 + $0x4] sm:$0xf]
    %v60 = vld [vmem:[%s57 + $0x8] sm:$0xf]
    %v61 = vld [vmem:[%s57 + $0xc] sm:$0xf]
    %v62 = vld [vmem:[%s57 + $0x10] sm:$0xf]
    %v63 = vld [vmem:[%s57 + $0x14] sm:$0xf]
    %v64 = vld [vmem:[%s57 + $0x18] sm:$0xf]
    %v65 = vld [vmem:[%s57 + $0x1c] sm:$0xf]
    %v66 = vld [vmem:[%s57 + $0x20] sm:$0xf]
    %v67 = vld [vmem:[%s57 + $0x24] sm:$0xf]
    %v68 = vld [vmem:[%s57 + $0x28] sm:$0xf]
    %v69 = vld [vmem:[%s57 + $0x2c] sm:$0xf]
    %v70 = vld [vmem:[%s57 + $0x30] sm:$0xf]
    %v71 = vld [vmem:[%s57 + $0x34] sm:$0xf]
    %v72 = vld [vmem:[%s57 + $0x38] sm:$0xf]
    %v73 = vld [vmem:[%s57 + $0x3c] sm:$0xf]
    %v74 = vld [vmem:[%s0] sm:$0xf]
    %v75 = vld [vmem:[%s0 + $0x4] sm:$0xf]
    %v76 = vld [vmem:[%s0 + $0x8] sm:$0xf]
    %v77 = vld [vmem:[%s0 + $0xc] sm:$0xf]
    %v78 = vld [vmem:[%s0 + $0x10] sm:$0xf]
    %v79 = vld [vmem:[%s0 + $0x14] sm:$0xf]
    %v80 = vld [vmem:[%s0 + $0x18] sm:$0xf]
    %v81 = vld [vmem:[%s0 + $0x1c] sm:$0xf]
    %v82 = vld [vmem:[%s0 + $0x20] sm:$0xf]
    %v83 = vld [vmem:[%s0 + $0x24] sm:$0xf]
    %v84 = vld [vmem:[%s0 + $0x28] sm:$0xf]
    %v85 = vld [vmem:[%s0 + $0x2c] sm:$0xf]
    %v86 = vld [vmem:[%s0 + $0x30] sm:$0xf]
    %v87 = vld [vmem:[%s0 + $0x34] sm:$0xf]
    %v88 = vld [vmem:[%s0 + $0x38] sm:$0xf]
    %v89 = vld [vmem:[%s0 + $0x3c] sm:$0xf]
    %v90 = vld [vmem:[%s2] sm:$0xf]
    %v91 = vld [vmem:[%s2 + $0x4] sm:$0xf]
    %v92 = vld [vmem:[%s2 + $0x8] sm:$0xf]
    %v93 = vld [vmem:[%s2 + $0xc] sm:$0xf]
    %v94 = vld [vmem:[%s2 + $0x10] sm:$0xf]
    %v95 = vld [vmem:[%s2 + $0x14] sm:$0xf]
    %v96 = vld [vmem:[%s2 + $0x18] sm:$0xf]
    %v97 = vld [vmem:[%s2 + $0x1c] sm:$0xf]
    %v98 = vld [vmem:[%s2 + $0x20] sm:$0xf]
    %v99 = vld [vmem:[%s2 + $0x24] sm:$0xf]
    %v100 = vld [vmem:[%s2 + $0x28] sm:$0xf]
    %v101 = vld [vmem:[%s2 + $0x2c] sm:$0xf]
    %v102 = vld [vmem:[%s2 + $0x30] sm:$0xf]
    %v103 = vld [vmem:[%s2 + $0x34] sm:$0xf]
    %v104 = vld [vmem:[%s2 + $0x38] sm:$0xf]
    %v105 = vld [vmem:[%s2 + $0x3c] sm:$0xf]
    %v122 = vunpack.c.l.b16 %v74
    %v123 = vunpack.c.l.b16 %v75
    %v124 = vunpack.c.l.b16 %v76
    %v125 = vunpack.c.l.b16 %v77
    %v126 = vunpack.c.l.b16 %v78
    %v127 = vunpack.c.l.b16 %v79
    %v128 = vunpack.c.l.b16 %v80
    %v129 = vunpack.c.l.b16 %v81
    %v130 = vunpack.c.l.b16 %v82
    %v131 = vunpack.c.l.b16 %v83
    %v132 = vunpack.c.l.b16 %v84
    %v133 = vunpack.c.l.b16 %v85
    %v134 = vunpack.c.l.b16 %v86
    %v135 = vunpack.c.l.b16 %v87
    %v136 = vunpack.c.l.b16 %v88
    %v137 = vunpack.c.l.b16 %v89
    %v138 = vpack.c.b16 %v123, %v122
    %v139 = vpack.c.b16 %v125, %v124
    %v140 = vpack.c.b16 %v127, %v126
    %v141 = vpack.c.b16 %v129, %v128
    %v142 = vpack.c.b16 %v131, %v130
    %v143 = vpack.c.b16 %v133, %v132
    %v144 = vpack.c.b16 %v135, %v134
    %v145 = vpack.c.b16 %v137, %v136
    %v170 = vunpack.c.l.b16 %v90
    %v171 = vunpack.c.l.b16 %v91
    %v172 = vunpack.c.l.b16 %v92
    %v173 = vunpack.c.l.b16 %v93
    %v174 = vunpack.c.l.b16 %v94
    %v175 = vunpack.c.l.b16 %v95
    %v176 = vunpack.c.l.b16 %v96
    %v177 = vunpack.c.l.b16 %v97
    %v178 = vunpack.c.l.b16 %v98
    %v179 = vunpack.c.l.b16 %v99
    %v180 = vunpack.c.l.b16 %v100
    %v181 = vunpack.c.l.b16 %v101
    %v182 = vunpack.c.l.b16 %v102
    %v183 = vunpack.c.l.b16 %v103
    %v184 = vunpack.c.l.b16 %v104
    %v185 = vunpack.c.l.b16 %v105
    %v186 = vpack.c.b16 %v171, %v170
    %v187 = vpack.c.b16 %v173, %v172
    %v188 = vpack.c.b16 %v175, %v174
    %v189 = vpack.c.b16 %v177, %v176
    %v190 = vpack.c.b16 %v179, %v178
    %v191 = vpack.c.b16 %v181, %v180
    %v192 = vpack.c.b16 %v183, %v182
    %v193 = vpack.c.b16 %v185, %v184
    %202 = vmatprep.subr.bf16.mxu0 0
    %203 = vmatpush1.bf16.msra.mxu0 %v186
    %204 = vmatprep.subr.bf16.mxu0 0
    %205 = vmatpush1.bf16.msra.mxu0 %v187
    %206 = vmatprep.subr.bf16.mxu0 0
    %207 = vmatpush1.bf16.msra.mxu0 %v188
    %208 = vmatprep.subr.bf16.mxu0 0
    %209 = vmatpush1.bf16.msra.mxu0 %v189
    %210 = vmatprep.subr.bf16.mxu0 0
    %211 = vmatpush1.bf16.msra.mxu0 %v190
    %212 = vmatprep.subr.bf16.mxu0 0
    %213 = vmatpush1.bf16.msra.mxu0 %v191
    %214 = vmatprep.subr.bf16.mxu0 0
    %215 = vmatpush1.bf16.msra.mxu0 %v192
    %216 = vmatprep.subr.bf16.mxu0 0
    %217 = vmatpush1.bf16.msra.mxu0 %v193
    %218 = vmatprep.subr.bf16.mxu0 0
    %219 = vmatpush1.bf16.msra.mxu0 0
    %220 = vmatprep.subr.bf16.mxu0 0
    %221 = vmatpush1.bf16.msra.mxu0 0
    %222 = vmatprep.subr.bf16.mxu0 0
    %223 = vmatpush1.bf16.msra.mxu0 0
    %224 = vmatprep.subr.bf16.mxu0 0
    %225 = vmatpush1.bf16.msra.mxu0 0
    %226 = vmatprep.subr.bf16.mxu0 0
    %227 = vmatpush1.bf16.msra.mxu0 0
    %228 = vmatprep.subr.bf16.mxu0 0
    %229 = vmatpush1.bf16.msra.mxu0 0
    %230 = vmatprep.subr.bf16.mxu0 0
    %231 = vmatpush1.bf16.msra.mxu0 0
    %232 = vmatprep.subr.bf16.mxu0 0
    %233 = vmatpush1.bf16.msra.mxu0 0
    %234 = vmatprep.mubr.bf16.mxu0 0
    %235 = vmatmul.mubr.bf16.gmra.mrb[0].mxu0 %v138
    %v236 = vpop.f32.mrb[0].mxu0
    %v237 = vadd.f32 0.0, %v236
    %v238 = vpop.f32.mrb[0].mxu0
    %v239 = vpop.f32.mrb[0].mxu0
    %v240 = vadd.f32 0.0, %v239
    %v241 = vpop.f32.mrb[0].mxu0
    %242 = vmatprep.mubr.bf16.mxu0 0
    %243 = vmatmul.mubr.bf16.gmra.mrb[0].mxu0 %v139
    %v244 = vpop.f32.mrb[0].mxu0
    %v245 = vadd.f32 0.0, %v244
    %v246 = vpop.f32.mrb[0].mxu0
    %v247 = vpop.f32.mrb[0].mxu0
    %v248 = vadd.f32 0.0, %v247
    %v249 = vpop.f32.mrb[0].mxu0
    %250 = vmatprep.mubr.bf16.mxu0 0
    %251 = vmatmul.mubr.bf16.gmra.mrb[0].mxu0 %v140
    %v252 = vpop.f32.mrb[0].mxu0
    %v253 = vadd.f32 0.0, %v252
    %v254 = vpop.f32.mrb[0].mxu0
    %v255 = vpop.f32.mrb[0].mxu0
    %v256 = vadd.f32 0.0, %v255
    %v257 = vpop.f32.mrb[0].mxu0
    %258 = vmatprep.mubr.bf16.mxu0 0
    %259 = vmatmul.mubr.bf16.gmra.mrb[0].mxu0 %v141
    %v260 = vpop.f32.mrb[0].mxu0
    %v261 = vadd.f32 0.0, %v260
    %v262 = vpop.f32.mrb[0].mxu0
    %v263 = vpop.f32.mrb[0].mxu0
    %v264 = vadd.f32 0.0, %v263
    %v265 = vpop.f32.mrb[0].mxu0
    %266 = vmatprep.mubr.bf16.mxu0 0
    %267 = vmatmul.mubr.bf16.gmra.mrb[0].mxu0 %v142
    %v268 = vpop.f32.mrb[0].mxu0
    %v269 = vadd.f32 0.0, %v268
    %v270 = vpop.f32.mrb[0].mxu0
    %v271 = vpop.f32.mrb[0].mxu0
    %v272 = vadd.f32 0.0, %v271
    %v273 = vpop.f32.mrb[0].mxu0
    %274 = vmatprep.mubr.bf16.mxu0 0
    %275 = vmatmul.mubr.bf16.gmra.mrb[0].mxu0 %v143
    %v276 = vpop.f32.mrb[0].mxu0
    %v277 = vadd.f32 0.0, %v276
    %v278 = vpop.f32.mrb[0].mxu0
    %v279 = vpop.f32.mrb[0].mxu0
    %v280 = vadd.f32 0.0, %v279
    %v281 = vpop.f32.mrb[0].mxu0
    %282 = vmatprep.mubr.bf16.mxu0 0
    %283 = vmatmul.mubr.bf16.gmra.mrb[0].mxu0 %v144
    %v284 = vpop.f32.mrb[0].mxu0
    %v285 = vadd.f32 0.0, %v284
    %v286 = vpop.f32.mrb[0].mxu0
    %v287 = vpop.f32.mrb[0].mxu0
    %v288 = vadd.f32 0.0, %v287
    %v289 = vpop.f32.mrb[0].mxu0
    %290 = vmatprep.mubr.bf16.mxu0 0
    %291 = vmatmul.mubr.bf16.gmra.mrb[0].mxu0 %v145
    %v292 = vpop.f32.mrb[0].mxu0
    %v293 = vadd.f32 0.0, %v292
    %v294 = vpop.f32.mrb[0].mxu0
    %v295 = vpop.f32.mrb[0].mxu0
    %v296 = vadd.f32 0.0, %v295
    %v297 = vpop.f32.mrb[0].mxu0
    %298 = vdwg.mxu0
    %v299 = vld [vmem:[%s1] sm:$0xff]
    %v300 = vld [vmem:[%s1 + $0x8] sm:$0xff]
    %v301 = vld [vmem:[%s1 + $0x10] sm:$0xff]
    %v302 = vld [vmem:[%s1 + $0x18] sm:$0xff]
    %v303 = vld [vmem:[%s1 + $0x20] sm:$0xff]
    %v304 = vld [vmem:[%s1 + $0x28] sm:$0xff]
    %v305 = vld [vmem:[%s1 + $0x30] sm:$0xff]
    %v306 = vld [vmem:[%s1 + $0x38] sm:$0xff]
    %v307 = vld [vmem:[%s1 + $0x40] sm:$0xff]
    %v308 = vld [vmem:[%s1 + $0x48] sm:$0xff]
    %v309 = vld [vmem:[%s1 + $0x50] sm:$0xff]
    %v310 = vld [vmem:[%s1 + $0x58] sm:$0xff]
    %v311 = vld [vmem:[%s1 + $0x60] sm:$0xff]
    %v312 = vld [vmem:[%s1 + $0x68] sm:$0xff]
    %v313 = vld [vmem:[%s1 + $0x70] sm:$0xff]
    %v314 = vld [vmem:[%s1 + $0x78] sm:$0xff]
    %316 = vset.pattern.permute.xlu0 0
    %317 = vperm.xlu0 %316, %v299
    %v318 = vpop.permute.xlu0 %317
    %321 = vset.pattern.permute.xlu0 0
    %322 = vperm.xlu0 %321, %v300
    %v323 = vpop.permute.xlu0 %322
    %326 = vset.pattern.permute.xlu0 0
    %327 = vperm.xlu0 %326, %v301
    %v328 = vpop.permute.xlu0 %327
    %331 = vset.pattern.permute.xlu0 0
    %332 = vperm.xlu0 %331, %v302
    %v333 = vpop.permute.xlu0 %332
    %336 = vset.pattern.permute.xlu0 0
    %337 = vperm.xlu0 %336, %v303
    %v338 = vpop.permute.xlu0 %337
    %341 = vset.pattern.permute.xlu0 0
    %342 = vperm.xlu0 %341, %v304
    %v343 = vpop.permute.xlu0 %342
    %346 = vset.pattern.permute.xlu0 0
    %347 = vperm.xlu0 %346, %v305
    %v348 = vpop.permute.xlu0 %347
    %351 = vset.pattern.permute.xlu0 0
    %352 = vperm.xlu0 %351, %v306
    %v353 = vpop.permute.xlu0 %352
    %356 = vset.pattern.permute.xlu0 0
    %357 = vperm.xlu0 %356, %v307
    %v358 = vpop.permute.xlu0 %357
    %361 = vset.pattern.permute.xlu0 0
    %362 = vperm.xlu0 %361, %v308
    %v363 = vpop.permute.xlu0 %362
    %366 = vset.pattern.permute.xlu0 0
    %367 = vperm.xlu0 %366, %v309
    %v368 = vpop.permute.xlu0 %367
    %371 = vset.pattern.permute.xlu0 0
    %372 = vperm.xlu0 %371, %v310
    %v373 = vpop.permute.xlu0 %372
    %376 = vset.pattern.permute.xlu0 0
    %377 = vperm.xlu0 %376, %v311
    %v378 = vpop.permute.xlu0 %377
    %381 = vset.pattern.permute.xlu0 0
    %382 = vperm.xlu0 %381, %v312
    %v383 = vpop.permute.xlu0 %382
    %386 = vset.pattern.permute.xlu0 0
    %387 = vperm.xlu0 %386, %v313
    %v388 = vpop.permute.xlu0 %387
    %391 = vset.pattern.permute.xlu0 0
    %392 = vperm.xlu0 %391, %v314
    %v393 = vpop.permute.xlu0 %392
    %v395 = vmul.f32 %v318, %v237
    %v396 = vmul.f32 %v323, %v240
    %v397 = vmul.f32 %v328, %v245
    %v398 = vmul.f32 %v333, %v248
    %v399 = vmul.f32 %v338, %v253
    %v400 = vmul.f32 %v343, %v256
    %v401 = vmul.f32 %v348, %v261
    %v402 = vmul.f32 %v353, %v264
    %v403 = vmul.f32 %v358, %v269
    %v404 = vmul.f32 %v363, %v272
    %v405 = vmul.f32 %v368, %v277
    %v406 = vmul.f32 %v373, %v280
    %v407 = vmul.f32 %v378, %v285
    %v408 = vmul.f32 %v383, %v288
    %v409 = vmul.f32 %v388, %v293
    %v410 = vmul.f32 %v393, %v296
    %v411 = vpack.c.bf16 %v396, %v395
    %v412 = vpack.c.bf16 %v398, %v397
    %v413 = vpack.c.bf16 %v400, %v399
    %v414 = vpack.c.bf16 %v402, %v401
    %v415 = vpack.c.bf16 %v404, %v403
    %v416 = vpack.c.bf16 %v406, %v405
    %v417 = vpack.c.bf16 %v408, %v407
    %v418 = vpack.c.bf16 %v410, %v409
    %v419 = vld [vmem:[#allocation2] sm:$0xf]
    %v420 = vld [vmem:[#allocation2 + $0x4] sm:$0xf]
    %v421 = vld [vmem:[#allocation2 + $0x8] sm:$0xf]
    %v422 = vld [vmem:[#allocation2 + $0xc] sm:$0xf]
    %v423 = vld [vmem:[#allocation2 + $0x10] sm:$0xf]
    %v424 = vld [vmem:[#allocation2 + $0x14] sm:$0xf]
    %v425 = vld [vmem:[#allocation2 + $0x18] sm:$0xf]
    %v426 = vld [vmem:[#allocation2 + $0x1c] sm:$0xf]
    %v427 = vld [vmem:[#allocation2 + $0x20] sm:$0xf]
    %v428 = vld [vmem:[#allocation2 + $0x24] sm:$0xf]
    %v429 = vld [vmem:[#allocation2 + $0x28] sm:$0xf]
    %v430 = vld [vmem:[#allocation2 + $0x2c] sm:$0xf]
    %v431 = vld [vmem:[#allocation2 + $0x30] sm:$0xf]
    %v432 = vld [vmem:[#allocation2 + $0x34] sm:$0xf]
    %v433 = vld [vmem:[#allocation2 + $0x38] sm:$0xf]
    %v434 = vld [vmem:[#allocation2 + $0x3c] sm:$0xf]
    %v435 = vld [vmem:[#allocation5] sm:$0xf]
    %v436 = vld [vmem:[#allocation5 + $0x4] sm:$0xf]
    %v437 = vld [vmem:[#allocation5 + $0x8] sm:$0xf]
    %v438 = vld [vmem:[#allocation5 + $0xc] sm:$0xf]
    %v439 = vld [vmem:[#allocation5 + $0x10] sm:$0xf]
    %v440 = vld [vmem:[#allocation5 + $0x14] sm:$0xf]
    %v441 = vld [vmem:[#allocation5 + $0x18] sm:$0xf]
    %v442 = vld [vmem:[#allocation5 + $0x1c] sm:$0xf]
    %v443 = vld [vmem:[#allocation5 + $0x20] sm:$0xf]
    %v444 = vld [vmem:[#allocation5 + $0x24] sm:$0xf]
    %v445 = vld [vmem:[#allocation5 + $0x28] sm:$0xf]
    %v446 = vld [vmem:[#allocation5 + $0x2c] sm:$0xf]
    %v447 = vld [vmem:[#allocation5 + $0x30] sm:$0xf]
    %v448 = vld [vmem:[#allocation5 + $0x34] sm:$0xf]
    %v449 = vld [vmem:[#allocation5 + $0x38] sm:$0xf]
    %v450 = vld [vmem:[#allocation5 + $0x3c] sm:$0xf]
    %v467 = vunpack.c.l.b16 %v435
    %v468 = vunpack.c.l.b16 %v436
    %v469 = vunpack.c.l.b16 %v437
    %v470 = vunpack.c.l.b16 %v438
    %v471 = vunpack.c.l.b16 %v439
    %v472 = vunpack.c.l.b16 %v440
    %v473 = vunpack.c.l.b16 %v441
    %v474 = vunpack.c.l.b16 %v442
    %v475 = vunpack.c.l.b16 %v443
    %v476 = vunpack.c.l.b16 %v444
    %v477 = vunpack.c.l.b16 %v445
    %v478 = vunpack.c.l.b16 %v446
    %v479 = vunpack.c.l.b16 %v447
    %v480 = vunpack.c.l.b16 %v448
    %v481 = vunpack.c.l.b16 %v449
    %v482 = vunpack.c.l.b16 %v450
    %v483 = vpack.c.b16 %v468, %v467
    %v484 = vpack.c.b16 %v470, %v469
    %v485 = vpack.c.b16 %v472, %v471
    %v486 = vpack.c.b16 %v474, %v473
    %v487 = vpack.c.b16 %v476, %v475
    %v488 = vpack.c.b16 %v478, %v477
    %v489 = vpack.c.b16 %v480, %v479
    %v490 = vpack.c.b16 %v482, %v481
    %499 = vmatprep.subr.bf16.mxu0 0
    %500 = vmatpush1.bf16.msra.mxu0 %v483
    %501 = vmatprep.subr.bf16.mxu0 0
    %502 = vmatpush1.bf16.msra.mxu0 %v484
    %503 = vmatprep.subr.bf16.mxu0 0
    %504 = vmatpush1.bf16.msra.mxu0 %v485
    %505 = vmatprep.subr.bf16.mxu0 0
    %506 = vmatpush1.bf16.msra.mxu0 %v486
    %507 = vmatprep.subr.bf16.mxu0 0
    %508 = vmatpush1.bf16.msra.mxu0 %v487
    %509 = vmatprep.subr.bf16.mxu0 0
    %510 = vmatpush1.bf16.msra.mxu0 %v488
    %511 = vmatprep.subr.bf16.mxu0 0
    %512 = vmatpush1.bf16.msra.mxu0 %v489
    %513 = vmatprep.subr.bf16.mxu0 0
    %514 = vmatpush1.bf16.msra.mxu0 %v490
    %515 = vmatprep.subr.bf16.mxu0 0
    %516 = vmatpush1.bf16.msra.mxu0 0
    %517 = vmatprep.subr.bf16.mxu0 0
    %518 = vmatpush1.bf16.msra.mxu0 0
    %519 = vmatprep.subr.bf16.mxu0 0
    %520 = vmatpush1.bf16.msra.mxu0 0
    %521 = vmatprep.subr.bf16.mxu0 0
    %522 = vmatpush1.bf16.msra.mxu0 0
    %523 = vmatprep.subr.bf16.mxu0 0
    %524 = vmatpush1.bf16.msra.mxu0 0
    %525 = vmatprep.subr.bf16.mxu0 0
    %526 = vmatpush1.bf16.msra.mxu0 0
    %527 = vmatprep.subr.bf16.mxu0 0
    %528 = vmatpush1.bf16.msra.mxu0 0
    %529 = vmatprep.subr.bf16.mxu0 0
    %530 = vmatpush1.bf16.msra.mxu0 0
    %531 = vmatprep.mubr.bf16.mxu0 0
    %532 = vmatmul.mubr.bf16.gmra.mrb[0].mxu0 %v411
    %v533 = vpop.f32.mrb[0].mxu0
    %v534 = vadd.f32 0.0, %v533
    %v535 = vpop.f32.mrb[0].mxu0
    %v536 = vpop.f32.mrb[0].mxu0
    %v537 = vadd.f32 0.0, %v536
    %v538 = vpop.f32.mrb[0].mxu0
    %539 = vmatprep.mubr.bf16.mxu0 0
    %540 = vmatmul.mubr.bf16.gmra.mrb[0].mxu0 %v412
    %v541 = vpop.f32.mrb[0].mxu0
    %v542 = vadd.f32 0.0, %v541
    %v543 = vpop.f32.mrb[0].mxu0
    %v544 = vpop.f32.mrb[0].mxu0
    %v545 = vadd.f32 0.0, %v544
    %v546 = vpop.f32.mrb[0].mxu0
    %547 = vmatprep.mubr.bf16.mxu0 0
    %548 = vmatmul.mubr.bf16.gmra.mrb[0].mxu0 %v413
    %v549 = vpop.f32.mrb[0].mxu0
    %v550 = vadd.f32 0.0, %v549
    %v551 = vpop.f32.mrb[0].mxu0
    %v552 = vpop.f32.mrb[0].mxu0
    %v553 = vadd.f32 0.0, %v552
    %v554 = vpop.f32.mrb[0].mxu0
    %555 = vmatprep.mubr.bf16.mxu0 0
    %556 = vmatmul.mubr.bf16.gmra.mrb[0].mxu0 %v414
    %v557 = vpop.f32.mrb[0].mxu0
    %v558 = vadd.f32 0.0, %v557
    %v559 = vpop.f32.mrb[0].mxu0
    %v560 = vpop.f32.mrb[0].mxu0
    %v561 = vadd.f32 0.0, %v560
    %v562 = vpop.f32.mrb[0].mxu0
    %563 = vmatprep.mubr.bf16.mxu0 0
    %564 = vmatmul.mubr.bf16.gmra.mrb[0].mxu0 %v415
    %v565 = vpop.f32.mrb[0].mxu0
    %v566 = vadd.f32 0.0, %v565
    %v567 = vpop.f32.mrb[0].mxu0
    %v568 = vpop.f32.mrb[0].mxu0
    %v569 = vadd.f32 0.0, %v568
    %v570 = vpop.f32.mrb[0].mxu0
    %571 = vmatprep.mubr.bf16.mxu0 0
    %572 = vmatmul.mubr.bf16.gmra.mrb[0].mxu0 %v416
    %v573 = vpop.f32.mrb[0].mxu0
    %v574 = vadd.f32 0.0, %v573
    %v575 = vpop.f32.mrb[0].mxu0
    %v576 = vpop.f32.mrb[0].mxu0
    %v577 = vadd.f32 0.0, %v576
    %v578 = vpop.f32.mrb[0].mxu0
    %579 = vmatprep.mubr.bf16.mxu0 0
    %580 = vmatmul.mubr.bf16.gmra.mrb[0].mxu0 %v417
    %v581 = vpop.f32.mrb[0].mxu0
    %v582 = vadd.f32 0.0, %v581
    %v583 = vpop.f32.mrb[0].mxu0
    %v584 = vpop.f32.mrb[0].mxu0
    %v585 = vadd.f32 0.0, %v584
    %v586 = vpop.f32.mrb[0].mxu0
    %587 = vmatprep.mubr.bf16.mxu0 0
    %588 = vmatmul.mubr.bf16.gmra.mrb[0].mxu0 %v418
    %v589 = vpop.f32.mrb[0].mxu0
    %v590 = vadd.f32 0.0, %v589
    %v591 = vpop.f32.mrb[0].mxu0
    %v592 = vpop.f32.mrb[0].mxu0
    %v593 = vadd.f32 0.0, %v592
    %v594 = vpop.f32.mrb[0].mxu0
    %595 = vdwg.mxu0
    %v612 = vunpack.c.l.b16 %v58
    %v613 = vunpack.c.l.b16 %v59
    %v614 = vunpack.c.l.b16 %v60
    %v615 = vunpack.c.l.b16 %v61
    %v616 = vunpack.c.l.b16 %v62
    %v617 = vunpack.c.l.b16 %v63
    %v618 = vunpack.c.l.b16 %v64
    %v619 = vunpack.c.l.b16 %v65
    %v620 = vunpack.c.l.b16 %v66
    %v621 = vunpack.c.l.b16 %v67
    %v622 = vunpack.c.l.b16 %v68
    %v623 = vunpack.c.l.b16 %v69
    %v624 = vunpack.c.l.b16 %v70
    %v625 = vunpack.c.l.b16 %v71
    %v626 = vunpack.c.l.b16 %v72
    %v627 = vunpack.c.l.b16 %v73
    %v628 = vpack.c.b16 %v613, %v612
    %v629 = vpack.c.b16 %v615, %v614
    %v630 = vpack.c.b16 %v617, %v616
    %v631 = vpack.c.b16 %v619, %v618
    %v632 = vpack.c.b16 %v621, %v620
    %v633 = vpack.c.b16 %v623, %v622
    %v634 = vpack.c.b16 %v625, %v624
    %v635 = vpack.c.b16 %v627, %v626
    %v660 = vunpack.c.l.b16 %v419
    %v661 = vunpack.c.l.b16 %v420
    %v662 = vunpack.c.l.b16 %v421
    %v663 = vunpack.c.l.b16 %v422
    %v664 = vunpack.c.l.b16 %v423
    %v665 = vunpack.c.l.b16 %v424
    %v666 = vunpack.c.l.b16 %v425
    %v667 = vunpack.c.l.b16 %v426
    %v668 = vunpack.c.l.b16 %v427
    %v669 = vunpack.c.l.b16 %v428
    %v670 = vunpack.c.l.b16 %v429
    %v671 = vunpack.c.l.b16 %v430
    %v672 = vunpack.c.l.b16 %v431
    %v673 = vunpack.c.l.b16 %v432
    %v674 = vunpack.c.l.b16 %v433
    %v675 = vunpack.c.l.b16 %v434
    %v676 = vpack.c.b16 %v661, %v660
    %v677 = vpack.c.b16 %v663, %v662
    %v678 = vpack.c.b16 %v665, %v664
    %v679 = vpack.c.b16 %v667, %v666
    %v680 = vpack.c.b16 %v669, %v668
    %v681 = vpack.c.b16 %v671, %v670
    %v682 = vpack.c.b16 %v673, %v672
    %v683 = vpack.c.b16 %v675, %v674
    %692 = vmatprep.subr.bf16.mxu0 0
    %693 = vmatpush1.bf16.msra.mxu0 %v676
    %694 = vmatprep.subr.bf16.mxu0 0
    %695 = vmatpush1.bf16.msra.mxu0 %v677
    %696 = vmatprep.subr.bf16.mxu0 0
    %697 = vmatpush1.bf16.msra.mxu0 %v678
    %698 = vmatprep.subr.bf16.mxu0 0
    %699 = vmatpush1.bf16.msra.mxu0 %v679
    %700 = vmatprep.subr.bf16.mxu0 0
    %701 = vmatpush1.bf16.msra.mxu0 %v680
    %702 = vmatprep.subr.bf16.mxu0 0
    %703 = vmatpush1.bf16.msra.mxu0 %v681
    %704 = vmatprep.subr.bf16.mxu0 0
    %705 = vmatpush1.bf16.msra.mxu0 %v682
    %706 = vmatprep.subr.bf16.mxu0 0
    %707 = vmatpush1.bf16.msra.mxu0 %v683
    %708 = vmatprep.subr.bf16.mxu0 0
    %709 = vmatpush1.bf16.msra.mxu0 0
    %710 = vmatprep.subr.bf16.mxu0 0
    %711 = vmatpush1.bf16.msra.mxu0 0
    %712 = vmatprep.subr.bf16.mxu0 0
    %713 = vmatpush1.bf16.msra.mxu0 0
    %714 = vmatprep.subr.bf16.mxu0 0
    %715 = vmatpush1.bf16.msra.mxu0 0
    %716 = vmatprep.subr.bf16.mxu0 0
    %717 = vmatpush1.bf16.msra.mxu0 0
    %718 = vmatprep.subr.bf16.mxu0 0
    %719 = vmatpush1.bf16.msra.mxu0 0
    %720 = vmatprep.subr.bf16.mxu0 0
    %721 = vmatpush1.bf16.msra.mxu0 0
    %722 = vmatprep.subr.bf16.mxu0 0
    %723 = vmatpush1.bf16.msra.mxu0 0
    %724 = vmatprep.mubr.bf16.mxu0 0
    %725 = vmatmul.mubr.bf16.gmra.mrb[0].mxu0 %v628
    %v726 = vpop.f32.mrb[0].mxu0
    %v727 = vadd.f32 %v534, %v726
    %v728 = vpop.f32.mrb[0].mxu0
    %v729 = vpop.f32.mrb[0].mxu0
    %v730 = vadd.f32 %v537, %v729
    %v731 = vpop.f32.mrb[0].mxu0
    %732 = vmatprep.mubr.bf16.mxu0 0
    %733 = vmatmul.mubr.bf16.gmra.mrb[0].mxu0 %v629
    %v734 = vpop.f32.mrb[0].mxu0
    %v735 = vadd.f32 %v542, %v734
    %v736 = vpop.f32.mrb[0].mxu0
    %v737 = vpop.f32.mrb[0].mxu0
    %v738 = vadd.f32 %v545, %v737
    %v739 = vpop.f32.mrb[0].mxu0
    %740 = vmatprep.mubr.bf16.mxu0 0
    %741 = vmatmul.mubr.bf16.gmra.mrb[0].mxu0 %v630
    %v742 = vpop.f32.mrb[0].mxu0
    %v743 = vadd.f32 %v550, %v742
    %v744 = vpop.f32.mrb[0].mxu0
    %v745 = vpop.f32.mrb[0].mxu0
    %v746 = vadd.f32 %v553, %v745
    %v747 = vpop.f32.mrb[0].mxu0
    %748 = vmatprep.mubr.bf16.mxu0 0
    %749 = vmatmul.mubr.bf16.gmra.mrb[0].mxu0 %v631
    %v750 = vpop.f32.mrb[0].mxu0
    %v751 = vadd.f32 %v558, %v750
    %v752 = vpop.f32.mrb[0].mxu0
    %v753 = vpop.f32.mrb[0].mxu0
    %v754 = vadd.f32 %v561, %v753
    %v755 = vpop.f32.mrb[0].mxu0
    %756 = vmatprep.mubr.bf16.mxu0 0
    %757 = vmatmul.mubr.bf16.gmra.mrb[0].mxu0 %v632
    %v758 = vpop.f32.mrb[0].mxu0
    %v759 = vadd.f32 %v566, %v758
    %v760 = vpop.f32.mrb[0].mxu0
    %v761 = vpop.f32.mrb[0].mxu0
    %v762 = vadd.f32 %v569, %v761
    %v763 = vpop.f32.mrb[0].mxu0
    %764 = vmatprep.mubr.bf16.mxu0 0
    %765 = vmatmul.mubr.bf16.gmra.mrb[0].mxu0 %v633
    %v766 = vpop.f32.mrb[0].mxu0
    %v767 = vadd.f32 %v574, %v766
    %v768 = vpop.f32.mrb[0].mxu0
    %v769 = vpop.f32.mrb[0].mxu0
    %v770 = vadd.f32 %v577, %v769
    %v771 = vpop.f32.mrb[0].mxu0
    %772 = vmatprep.mubr.bf16.mxu0 0
    %773 = vmatmul.mubr.bf16.gmra.mrb[0].mxu0 %v634
    %v774 = vpop.f32.mrb[0].mxu0
    %v775 = vadd.f32 %v582, %v774
    %v776 = vpop.f32.mrb[0].mxu0
    %v777 = vpop.f32.mrb[0].mxu0
    %v778 = vadd.f32 %v585, %v777
    %v779 = vpop.f32.mrb[0].mxu0
    %780 = vmatprep.mubr.bf16.mxu0 0
    %781 = vmatmul.mubr.bf16.gmra.mrb[0].mxu0 %v635
    %v782 = vpop.f32.mrb[0].mxu0
    %v783 = vadd.f32 %v590, %v782
    %v784 = vpop.f32.mrb[0].mxu0
    %v785 = vpop.f32.mrb[0].mxu0
    %v786 = vadd.f32 %v593, %v785
    %v787 = vpop.f32.mrb[0].mxu0
    %788 = vdwg.mxu0
    %v789 = vld [vmem:[%s5] sm:$0x1]
    %v791 = vlaneseq
    %v792 = vshrl.u32 %v791, 7
    %v793 = vsub.s32 0, %v792
    %v794 = vrot.slane %v789, %v793
    %v796 = vadd.f32 %v727, %v794
    %v797 = vadd.f32 %v730, %v794
    %v798 = vadd.f32 %v735, %v794
    %v799 = vadd.f32 %v738, %v794
    %v800 = vadd.f32 %v743, %v794
    %v801 = vadd.f32 %v746, %v794
    %v802 = vadd.f32 %v751, %v794
    %v803 = vadd.f32 %v754, %v794
    %v804 = vadd.f32 %v759, %v794
    %v805 = vadd.f32 %v762, %v794
    %v806 = vadd.f32 %v767, %v794
    %v807 = vadd.f32 %v770, %v794
    %v808 = vadd.f32 %v775, %v794
    %v809 = vadd.f32 %v778, %v794
    %v810 = vadd.f32 %v783, %v794
    %v811 = vadd.f32 %v786, %v794
    %v812 = vmax.f32 %v796, 0.0
    %v813 = vmax.f32 %v797, 0.0
    %v814 = vmax.f32 %v798, 0.0
    %v815 = vmax.f32 %v799, 0.0
    %v816 = vmax.f32 %v800, 0.0
    %v817 = vmax.f32 %v801, 0.0
    %v818 = vmax.f32 %v802, 0.0
    %v819 = vmax.f32 %v803, 0.0
    %v820 = vmax.f32 %v804, 0.0
    %v821 = vmax.f32 %v805, 0.0
    %v822 = vmax.f32 %v806, 0.0
    %v823 = vmax.f32 %v807, 0.0
    %v824 = vmax.f32 %v808, 0.0
    %v825 = vmax.f32 %v809, 0.0
    %v826 = vmax.f32 %v810, 0.0
    %v827 = vmax.f32 %v811, 0.0
    %v828 = vpack.c.bf16 %v813, %v812
    %v829 = vpack.c.bf16 %v815, %v814
    %v830 = vpack.c.bf16 %v817, %v816
    %v831 = vpack.c.bf16 %v819, %v818
    %v832 = vpack.c.bf16 %v821, %v820
    %v833 = vpack.c.bf16 %v823, %v822
    %v834 = vpack.c.bf16 %v825, %v824
    %v835 = vpack.c.bf16 %v827, %v826
    %v844 = vunpack.c.l.b16 %v828
    %v845 = vunpack.c.h.b16 %v828
    %v846 = vunpack.c.l.b16 %v829
    %v847 = vunpack.c.h.b16 %v829
    %v848 = vunpack.c.l.b16 %v830
    %v849 = vunpack.c.h.b16 %v830
    %v850 = vunpack.c.l.b16 %v831
    %v851 = vunpack.c.h.b16 %v831
    %v852 = vunpack.c.l.b16 %v832
    %v853 = vunpack.c.h.b16 %v832
    %v854 = vunpack.c.l.b16 %v833
    %v855 = vunpack.c.h.b16 %v833
    %v856 = vunpack.c.l.b16 %v834
    %v857 = vunpack.c.h.b16 %v834
    %v858 = vunpack.c.l.b16 %v835
    %v859 = vunpack.c.h.b16 %v835
    %v860 = vpack.c.b16 %v844, %v844
    %v861 = vpack.c.b16 %v845, %v845
    %v862 = vpack.c.b16 %v846, %v846
    %v863 = vpack.c.b16 %v847, %v847
    %v864 = vpack.c.b16 %v848, %v848
    %v865 = vpack.c.b16 %v849, %v849
    %v866 = vpack.c.b16 %v850, %v850
    %v867 = vpack.c.b16 %v851, %v851
    %v868 = vpack.c.b16 %v852, %v852
    %v869 = vpack.c.b16 %v853, %v853
    %v870 = vpack.c.b16 %v854, %v854
    %v871 = vpack.c.b16 %v855, %v855
    %v872 = vpack.c.b16 %v856, %v856
    %v873 = vpack.c.b16 %v857, %v857
    %v874 = vpack.c.b16 %v858, %v858
    %v875 = vpack.c.b16 %v859, %v859
    %892 = vst [vmem:[#allocation7] sm:$0xf] %v860
    %893 = vst [vmem:[#allocation7 + $0x4] sm:$0xf] %v861
    %894 = vst [vmem:[#allocation7 + $0x8] sm:$0xf] %v862
    %895 = vst [vmem:[#allocation7 + $0xc] sm:$0xf] %v863
    %896 = vst [vmem:[#allocation7 + $0x10] sm:$0xf] %v864
    %897 = vst [vmem:[#allocation7 + $0x14] sm:$0xf] %v865
    %898 = vst [vmem:[#allocation7 + $0x18] sm:$0xf] %v866
    %899 = vst [vmem:[#allocation7 + $0x1c] sm:$0xf] %v867
    %900 = vst [vmem:[#allocation7 + $0x20] sm:$0xf] %v868
    %901 = vst [vmem:[#allocation7 + $0x24] sm:$0xf] %v869
    %902 = vst [vmem:[#allocation7 + $0x28] sm:$0xf] %v870
    %903 = vst [vmem:[#allocation7 + $0x2c] sm:$0xf] %v871
    %904 = vst [vmem:[#allocation7 + $0x30] sm:$0xf] %v872
    %905 = vst [vmem:[#allocation7 + $0x34] sm:$0xf] %v873
    %906 = vst [vmem:[#allocation7 + $0x38] sm:$0xf] %v874
    %907 = vst [vmem:[#allocation7 + $0x3c] sm:$0xf] %v875
    // Predicated region
    $region34: #{tpu_custom_call.1} parent=1 // pred_check
      _
    $region35: #{tpu_custom_call.1} parent=1 // pred_check_branch
      %909 = sbr.rel (0) target = $region37
    $region36: #{tpu_custom_call.1} parent=1 // pred_region
      %s911 = ssub.s32 1024, 1024
      %912 = vsyncadd [#allocation4], %s911
      %s913 = sshll.u32 [#allocation7], 4
      %s914 = int_to_ptr.vmem [resolvable:$true] %s913
      %919 = dma.vmem_to_hbm [thread:$0]  %s914, 1024, %s6, [#allocation4], 64, 64, 4
    $region37: #{tpu_custom_call.1} parent=1 // pred_fallthru
      _
    // Predicated region
    $region38: #{tpu_custom_call.1} parent=1 // pred_check
      _
    $region39: #{tpu_custom_call.1} parent=1 // pred_check_branch
      %921 = sbr.rel (0) target = $region41
    $region40: #{tpu_custom_call.1} parent=1 // pred_region
      %922 = dma.done [#allocation4], 1024
    $region41: #{tpu_custom_call.1} parent=1 // pred_fallthru
      _
    %923 = vsyncpa [#allocation3], 1
    %924 = vsyncpa [#allocation6], 1
    %925 = vsyncpa [#allocation4], 1

</llo_original>
